<compile_context>
chip_gen: v7x
topology: tpu7x:2x2x1
jax: 0.10.0
libtpu: 0.0.40
codegen_flags: <defaults>
</compile_context>

<pallas_src>
import math

import jax
import jax.numpy as jnp
from jax.experimental import pallas as pl
from jax.experimental.pallas import tpu as pltpu

LN_EPS = 1e-12


def _round_up(x, m):
    return (x + m - 1) // m * m


# ----------------------------------------------------------------------------
# in-kernel math helpers
# ----------------------------------------------------------------------------
def _erf(x):
    # Abramowitz & Stegun 7.1.26 polynomial erf (|err| < 1.5e-7 ~ f32 eps),
    # built only from ops guaranteed to lower in Mosaic.
    p = 0.3275911
    a1, a2, a3, a4, a5 = (0.254829592, -0.284496736, 1.421413741,
                          -1.453152027, 1.061405429)
    ax = jnp.abs(x)
    t = 1.0 / (1.0 + p * ax)
    poly = ((((a5 * t + a4) * t + a3) * t + a2) * t + a1) * t
    e = 1.0 - poly * jnp.exp(-ax * ax)
    return jnp.where(x >= 0, e, -e)


def _gelu(x):
    # exact (erf-based) GELU, matching transformers ACT2FN["gelu"]
    return 0.5 * x * (1.0 + _erf(x * (1.0 / math.sqrt(2.0))))


def _layernorm(x, gamma, beta):
    mean = jnp.mean(x, axis=-1, keepdims=True)
    var = jnp.mean(jnp.square(x - mean), axis=-1, keepdims=True)
    return (x - mean) * jax.lax.rsqrt(var + LN_EPS) * gamma + beta


# ----------------------------------------------------------------------------
# fused kernel: dense -> GELU -> LayerNorm -> candidate matmul
# ----------------------------------------------------------------------------
def _ent_pred_head_kernel(x_ref, cand_ref, w_ref, b_ref, g_ref, beta_ref,
                          out_ref, t_ref):
    # The transform only depends on the batch index, so compute it once per
    # batch element (candidate-tile index 0 of the inner, sequential
    # "arbitrary" axis) and cache it in VMEM scratch for all candidate tiles.
    # Scratch is kept in f32 (robust layout, f32 element-wise precision); the
    # cast to the MXU dtype at the dot is a negligible per-step VPU cost.
    @pl.when(pl.program_id(1) == 0)
    def _():
        x = x_ref[0]                                              # [S, H]
        t = (jnp.dot(x, w_ref[...], preferred_element_type=jnp.float32)
             + b_ref[...])                                        # [S, He] f32
        t = _gelu(t)
        t_ref[...] = _layernorm(t, g_ref[...], beta_ref[...])

    cand = cand_ref[0]                                            # [He, TC]
    # scores = transform @ candidate_emb^T, in canonical [M,K]x[K,N] MXU form
    # with bf16 inputs and f32 accumulation; output tile is lane-dense
    # (TC multiple of 128) so stores are unmasked full-lane vst.
    scores = jnp.dot(t_ref[...].astype(cand.dtype), cand,
                     preferred_element_type=jnp.float32)
    out_ref[0] = scores.astype(out_ref.dtype)


def coke_bert_ent_prediction_head(hidden_states, candidate_emb, params, *,
                                  candidate_tile=1024,
                                  mxu_dtype=jnp.bfloat16):
    """hidden_states [B,S,H], candidate_emb [B,C,He] -> scores [B,S,C].

    candidate_tile: lane (N) width per grid step; rounded to a multiple of 128
      and capped at the (128-padded) candidate count.  1024 keeps the
      double-buffered working set small enough for v7x's 64 MiB VMEM at
      BERT-scale S/He while filling the 256-wide MXU of v6e/v7x.
    mxu_dtype: dtype fed to the MXU for the score matmul (f32 accumulate).
      bf16 is ~3x MXU throughput on v5e and halves candidate HBM traffic;
      pass jnp.float32 for exact scoring.
    """
    B, S, H = hidden_states.shape
    Bc, C, He = candidate_emb.shape
    assert Bc == B and params["w"].shape == (H, He)

    # Lane-dense candidate layout [B, He, C] + MXU dtype cast (one XLA op).
    cand_t = jnp.swapaxes(candidate_emb, 1, 2).astype(mxu_dtype)

    # Lane-dense tiling of the candidate axis; pad C so every output tile is a
    # full, unmasked 128-multiple store and the c axis always pipelines.
    tc = max(128, min(_round_up(C, 128), _round_up(candidate_tile, 128)))
    c_pad = _round_up(C, tc)
    if c_pad != C:
        cand_t = jnp.pad(cand_t, ((0, 0), (0, 0), (0, c_pad - C)))
    nc = c_pad // tc

    out_dtype = hidden_states.dtype

    # Rough double-buffered working set -> scoped VMEM limit (capped at the
    # v7x physical 64 MiB so a tile tuned here also runs on v7x).
    isz = lambda dt: jnp.dtype(dt).itemsize
    vmem_need = (2 * He * tc * isz(mxu_dtype)                 # candidate tiles
                 + 2 * S * tc * isz(out_dtype)                # output tiles
                 + 2 * S * H * isz(hidden_states.dtype)       # hidden tiles
                 + 2 * (H * He + 3 * He) * isz(params["w"].dtype)   # weights
                 + S * He * 4)                                # transform scratch
    vmem_limit = int(min(max(2 * vmem_need, 32 << 20), 64 << 20))

    def const(shape):
        n = len(shape)
        return pl.BlockSpec(shape, lambda b, c: (0,) * n)

    out = pl.pallas_call(
        _ent_pred_head_kernel,
        out_shape=jax.ShapeDtypeStruct((B, S, c_pad), out_dtype),
        grid=(B, nc),
        in_specs=[
            pl.BlockSpec((1, S, H), lambda b, c: (b, 0, 0)),       # hidden
            pl.BlockSpec((1, He, tc), lambda b, c: (b, 0, c)),     # candidates
            const((H, He)), const((1, He)),      # transform.dense W / b
            const((1, He)), const((1, He)),      # transform.LayerNorm g / b
        ],
        out_specs=pl.BlockSpec((1, S, tc), lambda b, c: (b, 0, c)),
        scratch_shapes=[pltpu.VMEM((S, He), jnp.float32)],
        compiler_params=pltpu.CompilerParams(
            dimension_semantics=("parallel", "arbitrary"),
            vmem_limit_bytes=vmem_limit),
    )(hidden_states, cand_t,
      params["w"], params["b"], params["ln_g"], params["ln_b"])

    return out[..., :C] if c_pad != C else out


# ----------------------------------------------------------------------------
# pure-JAX reference (for correctness check)
# ----------------------------------------------------------------------------
def _reference(hidden_states, candidate_emb, params):
    t = hidden_states @ params["w"] + params["b"]
    t = jax.nn.gelu(t, approximate=False)
    mean = jnp.mean(t, axis=-1, keepdims=True)
    var = jnp.mean(jnp.square(t - mean), axis=-1, keepdims=True)
    t = (t - mean) * jax.lax.rsqrt(var + LN_EPS) * params["ln_g"] + params["ln_b"]
    return jnp.einsum("bsh,bch->bsc", t, candidate_emb)


if __name__ == "__main__":
    B, S = 2, 8
    H = 32           # config.hidden_size
    He = 16          # config.hidden_size_ent
    C = 256          # number of candidate entities

    key = jax.random.PRNGKey(0)
    k_h, k_c, k_w, k_b, k_g, k_lb = jax.random.split(key, 6)

    hidden_states = jax.random.normal(k_h, (B, S, H), jnp.float32)
    candidate_emb = jax.random.normal(k_c, (B, C, He), jnp.float32)

    params = dict(
        w=jax.random.normal(k_w, (H, He), jnp.float32) * 0.02,
        b=jax.random.normal(k_b, (1, He), jnp.float32) * 0.02,
        ln_g=1.0 + jax.random.normal(k_g, (1, He), jnp.float32) * 0.02,
        ln_b=jax.random.normal(k_lb, (1, He), jnp.float32) * 0.02,
    )

    ref = _reference(hidden_states, candidate_emb, params)

    # 1) default (bf16 MXU inputs, f32 accumulate) -- relaxed tolerance
    out = coke_bert_ent_prediction_head(hidden_states, candidate_emb, params)
    jax.block_until_ready(out)
    assert out.shape == (B, S, C)
    assert jnp.all(jnp.isfinite(out))
    assert jnp.allclose(out, ref, rtol=2e-2, atol=2e-1), \
        float(jnp.max(jnp.abs(out - ref)))

    # 2) exact (f32 MXU) path -- tight tolerance
    out_f32 = coke_bert_ent_prediction_head(hidden_states, candidate_emb,
                                            params, mxu_dtype=jnp.float32)
    jax.block_until_ready(out_f32)
    assert jnp.allclose(out_f32, ref, rtol=1e-4, atol=1e-4), \
        float(jnp.max(jnp.abs(out_f32 - ref)))

    print("KERNEL_OK")
</pallas_src>

<mosaic_0001>
module attributes {stable_mosaic.version = 11 : i64} {
  func.func @_ent_pred_head_kernel(%arg0: i32, %arg1: i32, %arg2: memref<1x8x32xf32, #tpu.memory_space<vmem>>, %arg3: memref<1x16x256xbf16, #tpu.memory_space<vmem>>, %arg4: memref<32x16xf32, #tpu.memory_space<vmem>>, %arg5: memref<1x16xf32, #tpu.memory_space<vmem>>, %arg6: memref<1x16xf32, #tpu.memory_space<vmem>>, %arg7: memref<1x16xf32, #tpu.memory_space<vmem>>, %arg8: memref<1x8x256xf32, #tpu.memory_space<vmem>>, %arg9: memref<8x16xf32, #tpu.memory_space<vmem>>) attributes {dimension_semantics = [#tpu.dimension_semantics<parallel>, #tpu.dimension_semantics<arbitrary>], iteration_bounds = array<i64: 2, 1>, scalar_prefetch = 0 : i64, scratch_operands = 1 : i64, tpu.core_type = #tpu.core_type<tc>, window_params = [{transform_indices = @transform_0, window_bounds = array<i64: 1, 8, 32>}, {transform_indices = @transform_1, window_bounds = array<i64: 1, 16, 256>}, {pipeline_mode = #tpu.pipeline_mode<synchronous>, transform_indices = @transform_2, window_bounds = array<i64: 32, 16>}, {pipeline_mode = #tpu.pipeline_mode<synchronous>, transform_indices = @transform_3, window_bounds = array<i64: 1, 16>}, {pipeline_mode = #tpu.pipeline_mode<synchronous>, transform_indices = @transform_4, window_bounds = array<i64: 1, 16>}, {pipeline_mode = #tpu.pipeline_mode<synchronous>, transform_indices = @transform_5, window_bounds = array<i64: 1, 16>}, {transform_indices = @transform_6, window_bounds = array<i64: 1, 8, 256>}]} {
    %c0_i32 = arith.constant 0 : i32
    %0 = arith.cmpi eq, %arg1, %c0_i32 : i32
    %1 = arith.extui %0 : i1 to i32
    %c0_i32_0 = arith.constant 0 : i32
    %2 = arith.cmpi ne, %1, %c0_i32_0 : i32
    scf.if %2 {
      %c0_8 = arith.constant 0 : index
      %c0_9 = arith.constant 0 : index
      %c0_10 = arith.constant 0 : index
      %11 = vector.load %arg2[%c0_8, %c0_9, %c0_10] : memref<1x8x32xf32, #tpu.memory_space<vmem>>, vector<1x8x32xf32>
      %12 = vector.shape_cast %11 : vector<1x8x32xf32> to vector<8x32xf32>
      %c0_11 = arith.constant 0 : index
      %c0_12 = arith.constant 0 : index
      %13 = vector.load %arg4[%c0_11, %c0_12] : memref<32x16xf32, #tpu.memory_space<vmem>>, vector<32x16xf32>
      %cst_13 = arith.constant dense<0.000000e+00> : vector<8x16xf32>
      %14 = tpu.matmul %12, %13, %cst_13 {dimension_numbers = #tpu.dot_dimension_numbers<[1], [0], [0], [1], [0, 0, 1, 1], [], []>} : vector<8x32xf32>, vector<32x16xf32>, vector<8x16xf32> -> vector<8x16xf32>
      %c0_14 = arith.constant 0 : index
      %c0_15 = arith.constant 0 : index
      %15 = vector.load %arg5[%c0_14, %c0_15] : memref<1x16xf32, #tpu.memory_space<vmem>>, vector<1x16xf32>
      %16 = vector.broadcast %15 : vector<1x16xf32> to vector<8x16xf32>
      %17 = arith.addf %14, %16 : vector<8x16xf32>
      %cst_16 = arith.constant 5.000000e-01 : f32
      %18 = vector.broadcast %cst_16 : f32 to vector<8x16xf32>
      %19 = arith.mulf %18, %17 : vector<8x16xf32>
      %cst_17 = arith.constant 0.707106769 : f32
      %20 = vector.broadcast %cst_17 : f32 to vector<8x16xf32>
      %21 = arith.mulf %17, %20 : vector<8x16xf32>
      %22 = math.absf %21 : vector<8x16xf32>
      %cst_18 = arith.constant 0.327591091 : f32
      %23 = vector.broadcast %cst_18 : f32 to vector<8x16xf32>
      %24 = arith.mulf %23, %22 : vector<8x16xf32>
      %cst_19 = arith.constant 1.000000e+00 : f32
      %25 = vector.broadcast %cst_19 : f32 to vector<8x16xf32>
      %26 = arith.addf %25, %24 : vector<8x16xf32>
      %cst_20 = arith.constant 1.000000e+00 : f32
      %27 = vector.broadcast %cst_20 : f32 to vector<8x16xf32>
      %28 = arith.divf %27, %26 : vector<8x16xf32>
      %cst_21 = arith.constant 1.06140542 : f32
      %29 = vector.broadcast %cst_21 : f32 to vector<8x16xf32>
      %30 = arith.mulf %29, %28 : vector<8x16xf32>
      %cst_22 = arith.constant -1.45315206 : f32
      %31 = vector.broadcast %cst_22 : f32 to vector<8x16xf32>
      %32 = arith.addf %30, %31 : vector<8x16xf32>
      %33 = arith.mulf %32, %28 : vector<8x16xf32>
      %cst_23 = arith.constant 1.42141378 : f32
      %34 = vector.broadcast %cst_23 : f32 to vector<8x16xf32>
      %35 = arith.addf %33, %34 : vector<8x16xf32>
      %36 = arith.mulf %35, %28 : vector<8x16xf32>
      %cst_24 = arith.constant -0.284496725 : f32
      %37 = vector.broadcast %cst_24 : f32 to vector<8x16xf32>
      %38 = arith.addf %36, %37 : vector<8x16xf32>
      %39 = arith.mulf %38, %28 : vector<8x16xf32>
      %cst_25 = arith.constant 0.254829586 : f32
      %40 = vector.broadcast %cst_25 : f32 to vector<8x16xf32>
      %41 = arith.addf %39, %40 : vector<8x16xf32>
      %42 = arith.mulf %41, %28 : vector<8x16xf32>
      %cst_26 = arith.constant 0.000000e+00 : f32
      %43 = vector.broadcast %cst_26 : f32 to vector<8x16xf32>
      %44 = arith.subf %43, %22 : vector<8x16xf32>
      %45 = arith.mulf %44, %22 : vector<8x16xf32>
      %46 = math.exp %45 : vector<8x16xf32>
      %47 = arith.mulf %42, %46 : vector<8x16xf32>
      %cst_27 = arith.constant 1.000000e+00 : f32
      %48 = vector.broadcast %cst_27 : f32 to vector<8x16xf32>
      %49 = arith.subf %48, %47 : vector<8x16xf32>
      %cst_28 = arith.constant 0.000000e+00 : f32
      %50 = vector.broadcast %cst_28 : f32 to vector<8x16xf32>
      %51 = arith.cmpf oge, %21, %50 : vector<8x16xf32>
      %cst_29 = arith.constant 0.000000e+00 : f32
      %52 = vector.broadcast %cst_29 : f32 to vector<8x16xf32>
      %53 = arith.subf %52, %49 : vector<8x16xf32>
      %54 = arith.select %51, %49, %53 : vector<8x16xi1>, vector<8x16xf32>
      %cst_30 = arith.constant 1.000000e+00 : f32
      %55 = vector.broadcast %cst_30 : f32 to vector<8x16xf32>
      %56 = arith.addf %55, %54 : vector<8x16xf32>
      %57 = arith.mulf %19, %56 : vector<8x16xf32>
      %c0_31 = arith.constant 0 : index
      %c0_32 = arith.constant 0 : index
      %58 = vector.load %arg6[%c0_31, %c0_32] : memref<1x16xf32, #tpu.memory_space<vmem>>, vector<1x16xf32>
      %c0_33 = arith.constant 0 : index
      %c0_34 = arith.constant 0 : index
      %59 = vector.load %arg7[%c0_33, %c0_34] : memref<1x16xf32, #tpu.memory_space<vmem>>, vector<1x16xf32>
      %cst_35 = arith.constant dense<0.000000e+00> : vector<8xf32>
      %60 = vector.multi_reduction <add>, %57, %cst_35 [1] : vector<8x16xf32> to vector<8xf32>
      %61 = vector.shape_cast %60 : vector<8xf32> to vector<8x1xf32>
      %cst_36 = arith.constant 1.600000e+01 : f32
      %62 = vector.broadcast %cst_36 : f32 to vector<8x1xf32>
      %63 = arith.divf %61, %62 : vector<8x1xf32>
      %64 = vector.broadcast %63 : vector<8x1xf32> to vector<8x16xf32>
      %65 = arith.subf %57, %64 : vector<8x16xf32>
      %66 = arith.mulf %65, %65 : vector<8x16xf32>
      %cst_37 = arith.constant dense<0.000000e+00> : vector<8xf32>
      %67 = vector.multi_reduction <add>, %66, %cst_37 [1] : vector<8x16xf32> to vector<8xf32>
      %68 = vector.shape_cast %67 : vector<8xf32> to vector<8x1xf32>
      %cst_38 = arith.constant 1.600000e+01 : f32
      %69 = vector.broadcast %cst_38 : f32 to vector<8x1xf32>
      %70 = arith.divf %68, %69 : vector<8x1xf32>
      %71 = vector.broadcast %63 : vector<8x1xf32> to vector<8x16xf32>
      %72 = arith.subf %57, %71 : vector<8x16xf32>
      %cst_39 = arith.constant 9.99999996E-13 : f32
      %73 = vector.broadcast %cst_39 : f32 to vector<8x1xf32>
      %74 = arith.addf %70, %73 : vector<8x1xf32>
      %75 = math.rsqrt %74 : vector<8x1xf32>
      %76 = vector.broadcast %75 : vector<8x1xf32> to vector<8x16xf32>
      %77 = arith.mulf %72, %76 : vector<8x16xf32>
      %78 = vector.broadcast %58 : vector<1x16xf32> to vector<8x16xf32>
      %79 = arith.mulf %77, %78 : vector<8x16xf32>
      %80 = vector.broadcast %59 : vector<1x16xf32> to vector<8x16xf32>
      %81 = arith.addf %79, %80 : vector<8x16xf32>
      %c0_40 = arith.constant 0 : index
      %c0_41 = arith.constant 0 : index
      %82 = vector.load %arg9[%c0_40, %c0_41] : memref<8x16xf32, #tpu.memory_space<vmem>>, vector<8x16xf32>
      tpu.vector_store %arg9[%c0_40, %c0_41], %81 {strides = array<i32>} : memref<8x16xf32, #tpu.memory_space<vmem>>, vector<8x16xf32>,
    } else {
    }
    %c0 = arith.constant 0 : index
    %c0_1 = arith.constant 0 : index
    %c0_2 = arith.constant 0 : index
    %3 = vector.load %arg3[%c0, %c0_1, %c0_2] : memref<1x16x256xbf16, #tpu.memory_space<vmem>>, vector<1x16x256xbf16>
    %4 = vector.shape_cast %3 : vector<1x16x256xbf16> to vector<16x256xbf16>
    %c0_3 = arith.constant 0 : index
    %c0_4 = arith.constant 0 : index
    %5 = vector.load %arg9[%c0_3, %c0_4] : memref<8x16xf32, #tpu.memory_space<vmem>>, vector<8x16xf32>
    %6 = arith.truncf %5 : vector<8x16xf32> to vector<8x16xbf16>
    %cst = arith.constant dense<0.000000e+00> : vector<8x256xf32>
    %7 = tpu.matmul %6, %4, %cst {dimension_numbers = #tpu.dot_dimension_numbers<[1], [0], [0], [1], [0, 0, 1, 1], [], []>} : vector<8x16xbf16>, vector<16x256xbf16>, vector<8x256xf32> -> vector<8x256xf32>
    %c0_5 = arith.constant 0 : index
    %c0_6 = arith.constant 0 : index
    %c0_7 = arith.constant 0 : index
    %8 = vector.load %arg8[%c0_5, %c0_6, %c0_7] : memref<1x8x256xf32, #tpu.memory_space<vmem>>, vector<1x8x256xf32>
    %9 = vector.shape_cast %8 : vector<1x8x256xf32> to vector<8x256xf32>
    %10 = vector.shape_cast %7 : vector<8x256xf32> to vector<1x8x256xf32>
    tpu.vector_store %arg8[%c0_5, %c0_6, %c0_7], %10 {strides = array<i32>} : memref<1x8x256xf32, #tpu.memory_space<vmem>>, vector<1x8x256xf32>,
    return
  }
  func.func @transform_0(%arg0: i32, %arg1: i32) -> (i32, i32, i32) {
    %c0_i32 = arith.constant 0 : i32
    %c0_i32_0 = arith.constant 0 : i32
    %c0_i32_1 = arith.constant 0 : i32
    return %arg0, %c0_i32, %c0_i32_0 : i32, i32, i32
  }
  func.func @transform_1(%arg0: i32, %arg1: i32) -> (i32, i32, i32) {
    %c0_i32 = arith.constant 0 : i32
    %c0_i32_0 = arith.constant 0 : i32
    return %arg0, %c0_i32, %arg1 : i32, i32, i32
  }
  func.func @transform_2(%arg0: i32, %arg1: i32) -> (i32, i32) {
    %c0_i32 = arith.constant 0 : i32
    %c0_i32_0 = arith.constant 0 : i32
    %c0_i32_1 = arith.constant 0 : i32
    return %c0_i32, %c0_i32_0 : i32, i32
  }
  func.func @transform_3(%arg0: i32, %arg1: i32) -> (i32, i32) {
    %c0_i32 = arith.constant 0 : i32
    %c0_i32_0 = arith.constant 0 : i32
    %c0_i32_1 = arith.constant 0 : i32
    return %c0_i32, %c0_i32_0 : i32, i32
  }
  func.func @transform_4(%arg0: i32, %arg1: i32) -> (i32, i32) {
    %c0_i32 = arith.constant 0 : i32
    %c0_i32_0 = arith.constant 0 : i32
    %c0_i32_1 = arith.constant 0 : i32
    return %c0_i32, %c0_i32_0 : i32, i32
  }
  func.func @transform_5(%arg0: i32, %arg1: i32) -> (i32, i32) {
    %c0_i32 = arith.constant 0 : i32
    %c0_i32_0 = arith.constant 0 : i32
    %c0_i32_1 = arith.constant 0 : i32
    return %c0_i32, %c0_i32_0 : i32, i32
  }
  func.func @transform_6(%arg0: i32, %arg1: i32) -> (i32, i32, i32) {
    %c0_i32 = arith.constant 0 : i32
    %c0_i32_0 = arith.constant 0 : i32
    return %arg0, %c0_i32, %arg1 : i32, i32, i32
  }
}

</mosaic_0001>

<llo_original>
// kernel: tpu_custom_call.1
$region0: #{tpu_custom_call.1}
  #allocation0 [shape = 'u32[]', space=smem, size = 0x4, offset = 0x4, fixed_abs, tag = 'smem constant byte address 0x4 - core index']
  #allocation1 [shape = 'u32[144,128]{1,0:T(1,128)}', space=vmem, size = 0x12000, scoped, tag = 'internal scratch']
  #allocation2 [shape = 'f32[8,16]{1,0:T(8,128)}', space=vmem, size = 0x1000, scoped, tag = 'scratch operand']
  %s0 = inlined_call_operand.vmem [shape: f32[2,8,32], index: 0, kind: input, shape index: {}]
  %s1 = inlined_call_operand.vmem [shape: bf16[2,16,256], index: 1, kind: input, shape index: {}]
  %s2 = inlined_call_operand.vmem [shape: f32[32,16], index: 2, kind: input, shape index: {}]
  %s3 = inlined_call_operand.vmem [shape: f32[1,16], index: 3, kind: input, shape index: {}]
  %s4 = inlined_call_operand.vmem [shape: f32[1,16], index: 4, kind: input, shape index: {}]
  %s5 = inlined_call_operand.vmem [shape: f32[1,16], index: 5, kind: input, shape index: {}]
  %s6 = inlined_call_operand.hbm [shape: f32[2,8,256], index: 6, kind: output, shape index: {}]
  %s7 = sld [smem:[#allocation0]]
  $region61: #{tpu_custom_call.1} parent=0
    _
  %s9 = ssub.s32 1, %s7
  %s10 = scalar_select 0, %s9, %s7
  $region1: #{tpu_custom_call.1} parent=0
    #allocation3 [shape = 'u8[16384]{0}', space=vmem, size = 0x4000, scoped, tag = 'output window, operand 0']
    #allocation4 [shape = 's32[2]{0}', space=sflag, size = 0x8, scoped, tag = 'scoped memory for tpu_custom_call.1']
    %11 = vsyncpa [#allocation4], 0
    %s12 = scalar_lea.sflag [#allocation4], 1
    %13 = vsyncpa %s12, 0
    loop: start=0, step=1, limit=4
    $region2: #{tpu_custom_call.1} parent=1 // loop_pre_header
      _
    $region3: #{tpu_custom_call.1} parent=1 // loop_header
      %s15 = sphi 0, %s19
      %p16 = scmp.ge.s32.totalorder %s15, 4
      %s22 = sphi 0, %s34
      %s23 = sphi 0, %s30
      %s24 = sphi 0, %s22
      %s25 = sphi 0, %s23
      %s26 = sphi 0, %s24
      %s27 = sphi 0, %s25
      %s37 = sphi 0, %s39
      %s40 = sphi 0, %s37
      %s41 = sphi 0, %s40
      %s57 = sphi 0, %s41
      %s65 = sphi 0, %s67
      %s68 = sphi 0, %s65
      %s69 = sphi 0, %s68
      %s85 = sphi 0, %s69
      %s89 = sphi 0, %s89
      %s91 = sphi 0, %s89
      %s92 = sphi 0, %s91
      %s106 = sphi 0, %s92
      %s110 = sphi 0, %s110
      %s112 = sphi 0, %s110
      %s113 = sphi 0, %s112
      %s127 = sphi 0, %s113
      %s131 = sphi 0, %s131
      %s133 = sphi 0, %s131
      %s134 = sphi 0, %s133
      %s148 = sphi 0, %s134
      %s152 = sphi 0, %s152
      %s154 = sphi 0, %s152
      %s155 = sphi 0, %s154
      %s169 = sphi 0, %s155
      %s177 = sphi 0, %s179
      %s180 = sphi 0, %s177
      %s181 = sphi 0, %s180
      %s197 = sphi 0, %s181
    $region4: #{tpu_custom_call.1} parent=1 // loop_header_branch
      %18 = sbr.rel (%p16) target = $region8
    $region5: #{tpu_custom_call.1} parent=1 // loop_body
      %s20 = ssub.s32 %s15, 1
      %s21 = ssub.s32 %s15, 2
      %s28 = sadd.s32 1, %s23
      %p29 = scmp.ge.s32.totalorder %s28, 1
      %s30 = scalar_select %p29, 0, %s28
      %s31 = sadd.s32 1, %s22
      %s32 = scalar_select %p29, %s31, %s22
      %p33 = scmp.ge.s32.totalorder %s32, 2
      %s34 = scalar_select %p33, 0, %s32
      %s35 = ssub.s32 %s22, %s34
      %p36 = scmp.eq.s32.totalorder %s35, 0
      %s38 = sadd.s32 %s37, 1
      %s39 = scalar_select %p36, %s37, %s38
      %p42 = pneg %p36
      %p43 = scmp.eq.s32.totalorder %s15, 1
      %p44 = por %p42, %p43
      %p45 = scmp.ne.s32.totalorder %s37, %s40
      %p46 = scmp.eq.s32.totalorder %s15, 0
      %p47 = por %p45, %p46
      %p48 = scmp.ne.s32.totalorder %s37, %s40
      %p49 = scmp.eq.s32.totalorder %s20, 1
      %p50 = por %p48, %p49
      %p51 = scmp.ne.s32.totalorder %s40, %s41
      %p52 = scmp.eq.s32.totalorder %s20, 0
      %p53 = por %p51, %p52
      %p54 = scmp.ne.s32.totalorder %s40, %s41
      %p55 = scmp.eq.s32.totalorder %s21, 1
      %p56 = por %p54, %p55
      %p58 = scmp.ne.s32.totalorder %s41, %s57
      %p59 = scmp.eq.s32.totalorder %s21, 0
      %p60 = por %p58, %p59
      %s61 = ssub.s32 %s22, %s34
      %s62 = ssub.s32 %s23, %s30
      %s63 = sor.u32 %s61, %s62
      %p64 = scmp.eq.s32.totalorder %s63, 0
      %s66 = sadd.s32 %s65, 1
      %s67 = scalar_select %p64, %s65, %s66
      %p70 = pneg %p64
      %p71 = scmp.eq.s32.totalorder %s15, 1
      %p72 = por %p70, %p71
      %p73 = scmp.ne.s32.totalorder %s65, %s68
      %p74 = scmp.eq.s32.totalorder %s15, 0
      %p75 = por %p73, %p74
      %p76 = scmp.ne.s32.totalorder %s65, %s68
      %p77 = scmp.eq.s32.totalorder %s20, 1
      %p78 = por %p76, %p77
      %p79 = scmp.ne.s32.totalorder %s68, %s69
      %p80 = scmp.eq.s32.totalorder %s20, 0
      %p81 = por %p79, %p80
      %p82 = scmp.ne.s32.totalorder %s68, %s69
      %p83 = scmp.eq.s32.totalorder %s21, 1
      %p84 = por %p82, %p83
      %p86 = scmp.ne.s32.totalorder %s69, %s85
      %p87 = scmp.eq.s32.totalorder %s21, 0
      %p88 = por %p86, %p87
      %s90 = sadd.s32 %s89, 1
      %p93 = scmp.eq.s32.totalorder %s15, 1
      %p94 = scmp.ne.s32.totalorder %s89, %s91
      %p95 = scmp.eq.s32.totalorder %s15, 0
      %p96 = por %p94, %p95
      %p97 = scmp.ne.s32.totalorder %s89, %s91
      %p98 = scmp.eq.s32.totalorder %s20, 1
      %p99 = por %p97, %p98
      %p100 = scmp.ne.s32.totalorder %s91, %s92
      %p101 = scmp.eq.s32.totalorder %s20, 0
      %p102 = por %p100, %p101
      %p103 = scmp.ne.s32.totalorder %s91, %s92
      %p104 = scmp.eq.s32.totalorder %s21, 1
      %p105 = por %p103, %p104
      %p107 = scmp.ne.s32.totalorder %s92, %s106
      %p108 = scmp.eq.s32.totalorder %s21, 0
      %p109 = por %p107, %p108
      %s111 = sadd.s32 %s110, 1
      %p114 = scmp.eq.s32.totalorder %s15, 1
      %p115 = scmp.ne.s32.totalorder %s110, %s112
      %p116 = scmp.eq.s32.totalorder %s15, 0
      %p117 = por %p115, %p116
      %p118 = scmp.ne.s32.totalorder %s110, %s112
      %p119 = scmp.eq.s32.totalorder %s20, 1
      %p120 = por %p118, %p119
      %p121 = scmp.ne.s32.totalorder %s112, %s113
      %p122 = scmp.eq.s32.totalorder %s20, 0
      %p123 = por %p121, %p122
      %p124 = scmp.ne.s32.totalorder %s112, %s113
      %p125 = scmp.eq.s32.totalorder %s21, 1
      %p126 = por %p124, %p125
      %p128 = scmp.ne.s32.totalorder %s113, %s127
      %p129 = scmp.eq.s32.totalorder %s21, 0
      %p130 = por %p128, %p129
      %s132 = sadd.s32 %s131, 1
      %p135 = scmp.eq.s32.totalorder %s15, 1
      %p136 = scmp.ne.s32.totalorder %s131, %s133
      %p137 = scmp.eq.s32.totalorder %s15, 0
      %p138 = por %p136, %p137
      %p139 = scmp.ne.s32.totalorder %s131, %s133
      %p140 = scmp.eq.s32.totalorder %s20, 1
      %p141 = por %p139, %p140
      %p142 = scmp.ne.s32.totalorder %s133, %s134
      %p143 = scmp.eq.s32.totalorder %s20, 0
      %p144 = por %p142, %p143
      %p145 = scmp.ne.s32.totalorder %s133, %s134
      %p146 = scmp.eq.s32.totalorder %s21, 1
      %p147 = por %p145, %p146
      %p149 = scmp.ne.s32.totalorder %s134, %s148
      %p150 = scmp.eq.s32.totalorder %s21, 0
      %p151 = por %p149, %p150
      %s153 = sadd.s32 %s152, 1
      %p156 = scmp.eq.s32.totalorder %s15, 1
      %p157 = scmp.ne.s32.totalorder %s152, %s154
      %p158 = scmp.eq.s32.totalorder %s15, 0
      %p159 = por %p157, %p158
      %p160 = scmp.ne.s32.totalorder %s152, %s154
      %p161 = scmp.eq.s32.totalorder %s20, 1
      %p162 = por %p160, %p161
      %p163 = scmp.ne.s32.totalorder %s154, %s155
      %p164 = scmp.eq.s32.totalorder %s20, 0
      %p165 = por %p163, %p164
      %p166 = scmp.ne.s32.totalorder %s154, %s155
      %p167 = scmp.eq.s32.totalorder %s21, 1
      %p168 = por %p166, %p167
      %p170 = scmp.ne.s32.totalorder %s155, %s169
      %p171 = scmp.eq.s32.totalorder %s21, 0
      %p172 = por %p170, %p171
      %s173 = ssub.s32 %s22, %s34
      %s174 = ssub.s32 %s23, %s30
      %s175 = sor.u32 %s173, %s174
      %p176 = scmp.eq.s32.totalorder %s175, 0
      %s178 = sadd.s32 %s177, 1
      %s179 = scalar_select %p176, %s177, %s178
      %p182 = pneg %p176
      %p183 = scmp.eq.s32.totalorder %s15, 1
      %p184 = por %p182, %p183
      %p185 = scmp.ne.s32.totalorder %s177, %s180
      %p186 = scmp.eq.s32.totalorder %s15, 0
      %p187 = por %p185, %p186
      %p188 = scmp.ne.s32.totalorder %s177, %s180
      %p189 = scmp.eq.s32.totalorder %s20, 1
      %p190 = por %p188, %p189
      %p191 = scmp.ne.s32.totalorder %s180, %s181
      %p192 = scmp.eq.s32.totalorder %s20, 0
      %p193 = por %p191, %p192
      %p194 = scmp.ne.s32.totalorder %s180, %s181
      %p195 = scmp.eq.s32.totalorder %s21, 1
      %p196 = por %p194, %p195
      %p198 = scmp.ne.s32.totalorder %s181, %s197
      %p199 = scmp.eq.s32.totalorder %s21, 0
      %p200 = por %p198, %p199
      %p201 = scmp.le.s32.totalorder 1, %s15
      %p202 = scmp.lt.s32.totalorder %s15, 3
      %p203 = pnand %p201, %p202
      %p204 = pneg %p203
      // Predicated region
      $region9: #{tpu_custom_call.1} parent=5 // pred_check
        _
      $region10: #{tpu_custom_call.1} parent=5 // pred_check_branch
        %206 = sbr.rel (%p203) target = $region12
      $region11: #{tpu_custom_call.1} parent=5 // pred_region
        %s207 = ssub.s32 %s15, 1
        // Predicated region
        $region13: #{tpu_custom_call.1} parent=11 // pred_check
          %p208 = pneg %p102
        $region14: #{tpu_custom_call.1} parent=11 // pred_check_branch
          %210 = sbr.rel (%p208) target = $region16
        $region15: #{tpu_custom_call.1} parent=11 // pred_region
          _
        $region16: #{tpu_custom_call.1} parent=11 // pred_fallthru
          _
        // Predicated region
        $region17: #{tpu_custom_call.1} parent=11 // pred_check
          %p211 = pneg %p123
        $region18: #{tpu_custom_call.1} parent=11 // pred_check_branch
          %213 = sbr.rel (%p211) target = $region20
        $region19: #{tpu_custom_call.1} parent=11 // pred_region
          _
        $region20: #{tpu_custom_call.1} parent=11 // pred_fallthru
          _
        // Predicated region
        $region21: #{tpu_custom_call.1} parent=11 // pred_check
          %p214 = pneg %p144
        $region22: #{tpu_custom_call.1} parent=11 // pred_check_branch
          %216 = sbr.rel (%p214) target = $region24
        $region23: #{tpu_custom_call.1} parent=11 // pred_region
          _
        $region24: #{tpu_custom_call.1} parent=11 // pred_fallthru
          _
        // Predicated region
        $region25: #{tpu_custom_call.1} parent=11 // pred_check
          %p217 = pneg %p165
        $region26: #{tpu_custom_call.1} parent=11 // pred_check_branch
          %219 = sbr.rel (%p217) target = $region28
        $region27: #{tpu_custom_call.1} parent=11 // pred_region
          _
        $region28: #{tpu_custom_call.1} parent=11 // pred_fallthru
          _
      $region12: #{tpu_custom_call.1} parent=5 // pred_fallthru
        _
      %p220 = scmp.lt.s32.totalorder %s15, 2
      // Predicated region
      $region29: #{tpu_custom_call.1} parent=5 // pred_check
        %p221 = pneg %p220
      $region30: #{tpu_custom_call.1} parent=5 // pred_check_branch
        %223 = sbr.rel (%p221) target = $region32
      $region31: #{tpu_custom_call.1} parent=5 // pred_region
        // Predicated region
        $region33: #{tpu_custom_call.1} parent=31 // pred_check
          %p224 = pneg %p47
        $region34: #{tpu_custom_call.1} parent=31 // pred_check_branch
          %226 = sbr.rel (%p224) target = $region36
        $region35: #{tpu_custom_call.1} parent=31 // pred_region
          %p227 = scmp.lt.s32.totalorder %s22, 1
          %s228 = scalar_select %p227, %s22, 1
          %s229 = smul.addr %s228, 8
          %s230 = scalar_lea.vmem %s0, %s229
        $region36: #{tpu_custom_call.1} parent=31 // pred_fallthru
          _
        // Predicated region
        $region37: #{tpu_custom_call.1} parent=31 // pred_check
          %p231 = pneg %p75
        $region38: #{tpu_custom_call.1} parent=31 // pred_check_branch
          %233 = sbr.rel (%p231) target = $region40
        $region39: #{tpu_custom_call.1} parent=31 // pred_region
          %s234 = smul.u32 2, %s23
          %p235 = scmp.lt.s32.totalorder %s22, 1
          %s236 = scalar_select %p235, %s22, 1
          %p237 = scmp.lt.s32.totalorder %s234, 1
          %s238 = scalar_select %p237, %s234, 1
          %s239 = smul.addr %s236, 4
          %s240 = sadd.s32 %s238, %s239
          %s241 = smul.addr %s240, 4
          %s242 = scalar_lea.vmem %s1, %s241
          %s243 = smul.u32 2, %s23
        $region40: #{tpu_custom_call.1} parent=31 // pred_fallthru
          _
      $region32: #{tpu_custom_call.1} parent=5 // pred_fallthru
        _
      %p244 = scmp.le.s32.totalorder 1, %s15
      %p245 = scmp.lt.s32.totalorder %s15, 3
      %p246 = pnand %p244, %p245
      %p247 = pneg %p246
      // Predicated region
      $region41: #{tpu_custom_call.1} parent=5 // pred_check
        _
      $region42: #{tpu_custom_call.1} parent=5 // pred_check_branch
        %249 = sbr.rel (%p246) target = $region44
      $region43: #{tpu_custom_call.1} parent=5 // pred_region
        %s250 = ssub.s32 %s15, 1
        %p251 = scmp.lt.s32.totalorder %s24, 1
        %s252 = scalar_select %p251, %s24, 1
        %s253 = smul.addr %s252, 8
        %s254 = scalar_lea.vmem %s0, %s253
        %p255 = pneg %p53
        %p256 = pneg %p50
        %s257 = smul.u32 2, %s25
        %p258 = scmp.lt.s32.totalorder %s24, 1
        %s259 = scalar_select %p258, %s24, 1
        %p260 = scmp.lt.s32.totalorder %s257, 1
        %s261 = scalar_select %p260, %s257, 1
        %s262 = smul.addr %s259, 4
        %s263 = sadd.s32 %s261, %s262
        %s264 = smul.addr %s263, 4
        %s265 = scalar_lea.vmem %s1, %s264
        %p266 = pneg %p81
        %p267 = pneg %p78
        %p268 = pneg %p102
        %p269 = pneg %p99
        %p270 = pneg %p123
        %p271 = pneg %p120
        %p272 = pneg %p144
        %p273 = pneg %p141
        %p274 = pneg %p165
        %p275 = pneg %p162
        %p276 = pneg %p193
        %p277 = pneg %p190
        %s278 = sand.u32 %s180, 1
        %s279 = scalar_lea.sflag [#allocation4], %s278
        %s280 = sand.u32 %s180, 1
        %s281 = smul.addr %s280, 16
        %s282 = scalar_lea.vmem [#allocation3], %s281
        %p283 = scmp.lt.s32.totalorder %s24, 1
        %s284 = scalar_select %p283, %s24, 1
        %s285 = smul.addr %s284, 8
        %s286 = scalar_lea.vmem %s0, %s285
        %s287 = smul.u32 2, %s25
        %p288 = scmp.lt.s32.totalorder %s24, 1
        %s289 = scalar_select %p288, %s24, 1
        %p290 = scmp.lt.s32.totalorder %s287, 1
        %s291 = scalar_select %p290, %s287, 1
        %s292 = smul.addr %s289, 4
        %s293 = sadd.s32 %s291, %s292
        %s294 = smul.addr %s293, 4
        %s295 = scalar_lea.vmem %s1, %s294
        %s296 = smul.u32 2, %s25
        %s297 = smul.u32 2, %s25
        %p299 = scmp.eq.s32.totalorder %s25, 0
        // Predicated region
        $region45: #{tpu_custom_call.1} parent=43 // pred_check
          %p300 = pneg %p299
        $region46: #{tpu_custom_call.1} parent=43 // pred_check_branch
          %302 = sbr.rel (%p300) target = $region48
        $region47: #{tpu_custom_call.1} parent=43 // pred_region
          %v303 = vld [vmem:[%s286] sm:$0xff]
          %v304 = vld [vmem:[%s2] sm:$0xff]
          %v305 = vld [vmem:[%s2 + $0x8] sm:$0xff]
          %v306 = vld [vmem:[%s2 + $0x10] sm:$0xff]
          %v307 = vld [vmem:[%s2 + $0x18] sm:$0xff]
          %v308 = vld [vmem:[%s3] sm:$0x1]
          %v310 = vlaneseq
          %v311 = vshrl.u32 %v310, 7
          %v312 = vsub.s32 0, %v311
          %v313 = vrot.slane %v308, %v312
          %vm315 = vcmask 261120
          %v317 = vsel %vm315, %v303, 0
          %319 = vmatprep.subr.mxu0 0.0
          %320 = vmatpush1.msra.mxu0 %v304
          %321 = vmatprep.subr.mxu0 0.0
          %322 = vmatpush1.msra.mxu0 %v305
          %323 = vmatprep.subr.mxu0 0.0
          %324 = vmatpush1.msra.mxu0 %v306
          %325 = vmatprep.subr.mxu0 0.0
          %326 = vmatpush1.msra.mxu0 %v307
          %327 = vmatprep.subr.mxu0 0.0
          %328 = vmatpush1.msra.mxu0 0.0
          %329 = vmatprep.subr.mxu0 0.0
          %330 = vmatpush1.msra.mxu0 0.0
          %331 = vmatprep.subr.mxu0 0.0
          %332 = vmatpush1.msra.mxu0 0.0
          %333 = vmatprep.subr.mxu0 0.0
          %334 = vmatpush1.msra.mxu0 0.0
          %335 = vmatprep.subr.mxu0 0.0
          %336 = vmatpush1.msra.mxu0 0.0
          %337 = vmatprep.subr.mxu0 0.0
          %338 = vmatpush1.msra.mxu0 0.0
          %339 = vmatprep.subr.mxu0 0.0
          %340 = vmatpush1.msra.mxu0 0.0
          %341 = vmatprep.subr.mxu0 0.0
          %342 = vmatpush1.msra.mxu0 0.0
          %343 = vmatprep.subr.mxu0 0.0
          %344 = vmatpush1.msra.mxu0 0.0
          %345 = vmatprep.subr.mxu0 0.0
          %346 = vmatpush1.msra.mxu0 0.0
          %347 = vmatprep.subr.mxu0 0.0
          %348 = vmatpush1.msra.mxu0 0.0
          %349 = vmatprep.subr.mxu0 0.0
          %350 = vmatpush1.msra.mxu0 0.0
          %351 = vmatprep.subr.mxu0 0.0
          %352 = vmatpush1.msra.mxu0 0.0
          %353 = vmatprep.subr.mxu0 0.0
          %354 = vmatpush1.msra.mxu0 0.0
          %355 = vmatprep.subr.mxu0 0.0
          %356 = vmatpush1.msra.mxu0 0.0
          %357 = vmatprep.subr.mxu0 0.0
          %358 = vmatpush1.msra.mxu0 0.0
          %359 = vmatprep.subr.mxu0 0.0
          %360 = vmatpush1.msra.mxu0 0.0
          %361 = vmatprep.subr.mxu0 0.0
          %362 = vmatpush1.msra.mxu0 0.0
          %363 = vmatprep.subr.mxu0 0.0
          %364 = vmatpush1.msra.mxu0 0.0
          %365 = vmatprep.subr.mxu0 0.0
          %366 = vmatpush1.msra.mxu0 0.0
          %367 = vmatprep.subr.mxu0 0.0
          %368 = vmatpush1.msra.mxu0 0.0
          %369 = vmatprep.subr.mxu0 0.0
          %370 = vmatpush1.msra.mxu0 0.0
          %371 = vmatprep.subr.mxu0 0.0
          %372 = vmatpush1.msra.mxu0 0.0
          %373 = vmatprep.subr.mxu0 0.0
          %374 = vmatpush1.msra.mxu0 0.0
          %375 = vmatprep.subr.mxu0 0.0
          %376 = vmatpush1.msra.mxu0 0.0
          %377 = vmatprep.subr.mxu0 0.0
          %378 = vmatpush1.msra.mxu0 0.0
          %379 = vmatprep.subr.mxu0 0.0
          %380 = vmatpush1.msra.mxu0 0.0
          %381 = vmatprep.subr.mxu0 0.0
          %382 = vmatpush1.msra.mxu0 0.0
          %383 = vmatprep.mubr.f32.mxu0 0.0
          %384 = vmatmul.mubr.f32.gmra.mrb[0].mxu0 %v317
          %v385 = vpop.f32.mrb[0].mxu0
          %v386 = vadd.f32 %v313, %v385
          %v387 = vpop.f32.mrb[0].mxu0
          %388 = vdwg.mxu0
          %v389 = vmul.f32 %v386, 0.5
          %v390 = vmul.f32 %v386, 0.70710677
          %v391 = vand.u32 2147483647, %v390
          %v392 = vmul.f32 %v391, 0.3275911
          %v393 = vadd.f32 %v392, 1.0
          %v394 = vrcp.pop %v393
          %v395 = vmul.f32 1.0, %v394
          %v396 = vmul.f32 %v395, 1.0614054
          %v397 = vadd.f32 %v396, -1.4531521
          %v398 = vmul.f32 %v397, %v395
          %v399 = vadd.f32 %v398, 1.4214138
          %v400 = vmul.f32 %v399, %v395
          %v401 = vadd.f32 %v400, -0.28449672
          %v402 = vmul.f32 %v401, %v395
          %v403 = vadd.f32 %v402, 0.2548296
          %v404 = vmul.f32 %v403, %v395
          %v405 = vsub.f32 0.0, %v391
          %v406 = vmul.f32 %v405, %v391
          %v407 = vmul.f32 %v406, 1.442695
          %v408 = vpow.pop %v407
          %v409 = vmul.f32 %v404, %v408
          %v410 = vsub.f32 1.0, %v409
          %vm411 = vcmp.ge.f32.partialorder %v390, 0.0
          %v412 = vsub.f32 0.0, %v410
          %v413 = vsel %vm411, %v410, %v412
          %v414 = vadd.f32 %v413, 1.0
          %v415 = vmul.f32 %v389, %v414
          %v416 = vld [vmem:[%s4] sm:$0x1]
          %v417 = vld [vmem:[%s5] sm:$0x1]
          %vm418 = vcmask 130048
          %v419 = vsel %vm418, %v415, 0.0
          %420 = vadd.xlane.f32.xlu0 %v419
          %v421 = vpop.xlane.xlu0 %420
          %v422 = vrcp.pop 16.0
          %v423 = vmul.f32 %v421, %v422
          %v424 = vsub.f32 %v415, %v423
          %v425 = vmul.f32 %v424, %v424
          %v426 = vsel %vm418, %v425, 0.0
          %427 = vadd.xlane.f32.xlu0 %v426
          %v428 = vpop.xlane.xlu0 %427
          %v429 = vmul.f32 %v428, %v422
          %v430 = vadd.f32 %v429, 1e-12
          %v431 = vrsqrt.pop %v430
          %v432 = vmul.f32 %v424, %v431
          %v434 = vlaneseq
          %v435 = vshrl.u32 %v434, 7
          %v436 = vsub.s32 0, %v435
          %v437 = vrot.slane %v416, %v436
          %v439 = vmul.f32 %v432, %v437
          %v441 = vlaneseq
          %v442 = vshrl.u32 %v441, 7
          %v443 = vsub.s32 0, %v442
          %v444 = vrot.slane %v417, %v443
          %v446 = vadd.f32 %v439, %v444
          %447 = vst.msk [vmem:[#allocation2] sm:$0xff] %vm418, %v446
        $region48: #{tpu_custom_call.1} parent=43 // pred_fallthru
          _
        %v448 = vld [vmem:[%s295] sm:$0xff]
        %v449 = vld [vmem:[%s295 + $0x8] sm:$0xff]
        %v450 = vld [vmem:[#allocation2] sm:$0xff]
        %v451 = vpack.c.bf16 %v450, %v450
        %v454 = vunpack.c.l.b16 %v448
        %v455 = vunpack.c.h.b16 %v448
        %v456 = vunpack.c.l.b16 %v449
        %v457 = vunpack.c.h.b16 %v449
        %v458 = vpack.c.b16 %v456, %v454
        %v459 = vpack.c.b16 %v457, %v455
        %vm462 = vcmask 130048
        %v464 = vsel %vm462, %v451, 0
        %466 = vmatprep.subr.bf16.mxu0 %v459
        %467 = vmatpush1.bf16.msra.mxu0 %v458
        %468 = vmatprep.subr.bf16.mxu0 0
        %469 = vmatpush1.bf16.msra.mxu0 0
        %470 = vmatprep.subr.bf16.mxu0 0
        %471 = vmatpush1.bf16.msra.mxu0 0
        %472 = vmatprep.subr.bf16.mxu0 0
        %473 = vmatpush1.bf16.msra.mxu0 0
        %474 = vmatprep.subr.bf16.mxu0 0
        %475 = vmatpush1.bf16.msra.mxu0 0
        %476 = vmatprep.subr.bf16.mxu0 0
        %477 = vmatpush1.bf16.msra.mxu0 0
        %478 = vmatprep.subr.bf16.mxu0 0
        %479 = vmatpush1.bf16.msra.mxu0 0
        %480 = vmatprep.subr.bf16.mxu0 0
        %481 = vmatpush1.bf16.msra.mxu0 0
        %482 = vmatprep.subr.bf16.mxu0 0
        %483 = vmatpush1.bf16.msra.mxu0 0
        %484 = vmatprep.subr.bf16.mxu0 0
        %485 = vmatpush1.bf16.msra.mxu0 0
        %486 = vmatprep.subr.bf16.mxu0 0
        %487 = vmatpush1.bf16.msra.mxu0 0
        %488 = vmatprep.subr.bf16.mxu0 0
        %489 = vmatpush1.bf16.msra.mxu0 0
        %490 = vmatprep.subr.bf16.mxu0 0
        %491 = vmatpush1.bf16.msra.mxu0 0
        %492 = vmatprep.subr.bf16.mxu0 0
        %493 = vmatpush1.bf16.msra.mxu0 0
        %494 = vmatprep.subr.bf16.mxu0 0
        %495 = vmatpush1.bf16.msra.mxu0 0
        %496 = vmatprep.subr.bf16.mxu0 0
        %497 = vmatpush1.bf16.msra.mxu0 0
        %498 = vmatprep.mubr.bf16.mxu0 0
        %499 = vmatmul.mubr.bf16.gmra.mrb[0].mxu0 %v464
        %v500 = vpop.f32.mrb[0].mxu0
        %v501 = vadd.f32 0.0, %v500
        %v502 = vpop.f32.mrb[0].mxu0
        %v503 = vadd.f32 0.0, %v502
        %v504 = vpop.f32.mrb[0].mxu0
        %v505 = vpop.f32.mrb[0].mxu0
        %506 = vdwg.mxu0
        %507 = vst [vmem:[%s282] sm:$0xff] %v501
        %508 = vst [vmem:[%s282 + $0x8] sm:$0xff] %v503
        %s509 = sand.u32 %s180, 1
        %s510 = scalar_lea.sflag [#allocation4], %s509
        %s511 = sand.u32 %s180, 1
        %s512 = smul.addr %s511, 16
        %s513 = scalar_lea.vmem [#allocation3], %s512
        // Predicated region
        $region49: #{tpu_custom_call.1} parent=43 // pred_check
          %p514 = pneg %p190
        $region50: #{tpu_custom_call.1} parent=43 // pred_check_branch
          %516 = sbr.rel (%p514) target = $region52
        $region51: #{tpu_custom_call.1} parent=43 // pred_region
          %s517 = smul.u32 2, %s25
          %s519 = ssub.s32 256, 256
          %520 = vsyncadd %s510, %s519
          %s521 = smul.addr %s24, 2
          %s522 = sadd.s32 %s517, %s521
          %s523 = smul.addr %s522, 128
          %s524 = scalar_lea.hbm %s6, %s523
          %s526 = sshll.u32 %s513, 4
          %s527 = int_to_ptr.vmem [resolvable:$true] %s526
          %529 = dma.vmem_to_hbm [thread:$0]  %s527, 256, %s524, %s510
        $region52: #{tpu_custom_call.1} parent=43 // pred_fallthru
          _
      $region44: #{tpu_custom_call.1} parent=5 // pred_fallthru
        _
      %p530 = scmp.le.s32.totalorder 2, %s15
      // Predicated region
      $region53: #{tpu_custom_call.1} parent=5 // pred_check
        %p531 = pneg %p530
      $region54: #{tpu_custom_call.1} parent=5 // pred_check_branch
        %533 = sbr.rel (%p531) target = $region56
      $region55: #{tpu_custom_call.1} parent=5 // pred_region
        %s534 = ssub.s32 %s15, 2
        // Predicated region
        $region57: #{tpu_custom_call.1} parent=55 // pred_check
          %p535 = pneg %p196
        $region58: #{tpu_custom_call.1} parent=55 // pred_check_branch
          %537 = sbr.rel (%p535) target = $region60
        $region59: #{tpu_custom_call.1} parent=55 // pred_region
          %s538 = sand.u32 %s181, 1
          %s539 = scalar_lea.sflag [#allocation4], %s538
          %s540 = sand.u32 %s181, 1
          %s541 = smul.addr %s540, 16
          %s542 = scalar_lea.vmem [#allocation3], %s541
          %543 = dma.done %s539, 256
        $region60: #{tpu_custom_call.1} parent=55 // pred_fallthru
          _
      $region56: #{tpu_custom_call.1} parent=5 // pred_fallthru
        _
    $region6: #{tpu_custom_call.1} parent=1 // loop_footer
      %s19 = sadd.s32 1, %s15
    $region7: #{tpu_custom_call.1} parent=1 // loop_footer_branch
      %14 = sbr.rel target = $region3
    $region8: #{tpu_custom_call.1} parent=1 // loop_exit
      _
    %544 = vsyncpa [#allocation4], 1
    %s545 = scalar_lea.sflag [#allocation4], 1
    %546 = vsyncpa %s545, 1

</llo_original>
